<compile_context>
chip_gen: v6e
topology: v6e:2x2x1
jax: 0.10.0
libtpu: 0.0.40
codegen_flags: <defaults>
</compile_context>

<pallas_src>
import jax
import jax.numpy as jnp
from jax.experimental import pallas as pl
from jax.experimental.pallas import tpu as pltpu


# ---------------------------------------------------------------------------
# Kernel
# ---------------------------------------------------------------------------
# Grid = (B graphs, 2 layer passes, R adjacency row-blocks).
#   layer pass 0: h1 = relu(adj @ (x  @ W1) + b1)   (all N rows, streamed by row block)
#   layer pass 1: h2 = relu(adj @ (h1 @ W2) + b2)   (all N rows, streamed by row block)
#   finalize (last step of each graph):
#       h3[0:8] = relu(adj[0:8, :] @ (h2 @ W3) + b3)       # only rows 0/1 are consumed
#       out     = h3[0] @ fcA + h3[1] @ fcB + fc_bias       # == cat([h3[0], h3[1]]) @ fcW.T + b
def gcn_fused_kernel(adj_ref, adjh_ref, x_ref, w1_ref, w2_ref, b_ref,
                     w3_ref, b3_ref, fca_ref, fcb_ref, fcbias_ref,
                     out_ref, xw_ref, h_ref):
    l = pl.program_id(1)          # layer pass: 0 -> conv1, 1 -> conv2
    r = pl.program_id(2)          # adjacency row-block index
    TR = adj_ref.shape[1]

    # ---- per-layer precompute XW = h_prev @ W_l (once per layer pass) ----
    @pl.when(jnp.logical_and(l == 0, r == 0))
    def _():
        xw_ref[...] = jnp.dot(x_ref[0], w1_ref[...],
                              preferred_element_type=jnp.float32).astype(jnp.bfloat16)

    @pl.when(jnp.logical_and(l > 0, r == 0))
    def _():
        xw_ref[...] = jnp.dot(h_ref[...].astype(jnp.bfloat16), w2_ref[...],
                              preferred_element_type=jnp.float32).astype(jnp.bfloat16)

    # ---- streamed aggregation for this row block: relu(adj_blk @ XW + b_l) ----
    agg = jnp.dot(adj_ref[0], xw_ref[...], preferred_element_type=jnp.float32)
    row0 = pl.multiple_of(r * TR, 8)
    h_ref[pl.ds(row0, TR), :] = jnp.maximum(agg + b_ref[0], 0.0)

    # ---- finalize: conv3 restricted to the rows the fc head actually reads ----
    @pl.when(jnp.logical_and(l == pl.num_programs(1) - 1,
                             r == pl.num_programs(2) - 1))
    def _():
        xw3 = jnp.dot(h_ref[...].astype(jnp.bfloat16), w3_ref[...],
                      preferred_element_type=jnp.float32)              # (N_pad, H)
        agg3 = jnp.dot(adjh_ref[0], xw3.astype(jnp.bfloat16),
                       preferred_element_type=jnp.float32)             # (8, H)
        h3 = jnp.maximum(agg3 + b3_ref[...], 0.0)                      # rows 0/1 are real
        out = (jnp.dot(h3[0:1, :], fca_ref[...], preferred_element_type=jnp.float32)
               + jnp.dot(h3[1:2, :], fcb_ref[...], preferred_element_type=jnp.float32)
               + fcbias_ref[...])                                      # (1, Dout)
        out_ref[...] = out.reshape(out_ref.shape)


# ---------------------------------------------------------------------------
# Wrappers
# ---------------------------------------------------------------------------
def _round_up(x, m):
    return ((x + m - 1) // m) * m


def build_normalized_adjacency(edge_index, num_nodes):
    """Dense D^-1/2 (A + I) D^-1/2 from edge_index (PyG gcn_norm semantics)."""
    src = edge_index[0]
    dst = edge_index[1]
    adj = jnp.zeros((num_nodes, num_nodes), jnp.float32).at[dst, src].add(1.0)
    adj = adj + jnp.eye(num_nodes, dtype=jnp.float32)
    deg = adj.sum(axis=1)
    dis = jnp.where(deg > 0, jax.lax.rsqrt(deg), 0.0)
    return dis[:, None] * adj * dis[None, :]


def gcn_forward_batched(x, adj_norm, params):
    """Fused GCN forward for a batch of graphs.

    x:        (B, N, F_in) float32 node features
    adj_norm: (B, N, N)    float32 normalized adjacency (with self-loops)
    returns:  (B, output_dim) float32
    """
    B, N, F_in = x.shape
    H = params["w1"].shape[1]
    Dout = params["fc_b"].shape[0]
    assert N >= 2, "forward reads node 0 and node 1"
    assert 2 * H == params["fc_w"].shape[1]

    # Adjacency row-block size: sized so double-buffered bf16 blocks + resident
    # operands stay far below v7x's 32 MiB default scoped VMEM (smallest part).
    if N <= 256:
        N_pad = _round_up(max(N, 8), 8)
        TR = N_pad
    else:
        TR = 256
        N_pad = _round_up(N, TR)
    R = N_pad // TR

    # --- pack / pad / cast operands (bf16 for MXU operands, f32 accumulate) ---
    adj_p = jnp.zeros((B, N_pad, N_pad), jnp.float32).at[:, :N, :N].set(adj_norm)
    adj_bf = adj_p.astype(jnp.bfloat16)            # streamed (TR, N_pad) row blocks
    adj_head = adj_bf[:, :8, :]                    # conv3 only needs rows 0/1 (pad to 8)

    x_p = jnp.zeros((B, N_pad, F_in), jnp.float32).at[:, :N, :].set(x).astype(jnp.bfloat16)

    w1 = params["w1"].astype(jnp.bfloat16)                         # (F_in, H)
    w2 = params["w2"].astype(jnp.bfloat16)                         # (H, H)
    w3 = params["w3"].astype(jnp.bfloat16)                         # (H, H)
    b_stack = jnp.stack([params["b1"], params["b2"]]).reshape(2, 1, H).astype(jnp.float32)
    b3 = params["b3"].reshape(1, H).astype(jnp.float32)
    fca = params["fc_w"][:, :H].T.astype(jnp.float32)              # (H, Dout) -> node 0
    fcb = params["fc_w"][:, H:].T.astype(jnp.float32)              # (H, Dout) -> node 1
    fcbias = params["fc_b"].reshape(1, Dout).astype(jnp.float32)

    # --- VMEM budget (double-buffered adj stream + resident h/xw scratch) ---
    est = (2 * TR * N_pad * 2          # double-buffered adj row blocks (bf16)
           + 8 * N_pad * 2             # adj head
           + N_pad * max(F_in, 8) * 2  # x
           + N_pad * H * (2 + 4)       # xw (bf16) + h (f32) scratch
           + 4 * H * H * 2
           + (2 << 20))                # headroom for small operands / pipeline state
    vmem_limit = int(min(max(2 * est, 32 * 1024 * 1024), 100 * 1024 * 1024))

    grid = (B, 2, R)
    out = pl.pallas_call(
        gcn_fused_kernel,
        out_shape=jax.ShapeDtypeStruct((B, 1, Dout), jnp.float32),
        grid_spec=pltpu.PrefetchScalarGridSpec(
            num_scalar_prefetch=0,
            grid=grid,
            in_specs=[
                pl.BlockSpec((1, TR, N_pad), lambda b, l, r: (b, r, 0)),   # adj (streamed)
                pl.BlockSpec((1, 8, N_pad), lambda b, l, r: (b, 0, 0)),    # adj head rows
                pl.BlockSpec((1, N_pad, F_in), lambda b, l, r: (b, 0, 0)), # x
                pl.BlockSpec((F_in, H), lambda b, l, r: (0, 0)),           # W1
                pl.BlockSpec((H, H), lambda b, l, r: (0, 0)),              # W2
                pl.BlockSpec((1, 1, H), lambda b, l, r: (l, 0, 0)),        # b1/b2 by layer
                pl.BlockSpec((H, H), lambda b, l, r: (0, 0)),              # W3
                pl.BlockSpec((1, H), lambda b, l, r: (0, 0)),              # b3
                pl.BlockSpec((H, Dout), lambda b, l, r: (0, 0)),           # fc slice (node 0)
                pl.BlockSpec((H, Dout), lambda b, l, r: (0, 0)),           # fc slice (node 1)
                pl.BlockSpec((1, Dout), lambda b, l, r: (0, 0)),           # fc bias
            ],
            out_specs=pl.BlockSpec((1, 1, Dout), lambda b, l, r: (b, 0, 0)),
            scratch_shapes=[
                pltpu.VMEM((N_pad, H), jnp.bfloat16),   # XW = h_prev @ W_l
                pltpu.VMEM((N_pad, H), jnp.float32),    # full h of current layer
            ],
        ),
        compiler_params=pltpu.CompilerParams(
            # batch axis shards across v7x's two TensorCores; layer/row-block
            # axes carry a scratch dependency and must remain sequential.
            dimension_semantics=("parallel", "arbitrary", "arbitrary"),
            vmem_limit_bytes=vmem_limit,
        ),
    )(adj_bf, adj_head, x_p, w1, w2, b_stack, w3, b3, fca, fcb, fcbias)

    return out.reshape(B, Dout)


def gcn_forward(x, edge_index, params):
    """Single-graph forward matching the torch module signature (x, edge_index)."""
    adj_norm = build_normalized_adjacency(edge_index, x.shape[0])
    return gcn_forward_batched(x[None], adj_norm[None], params)[0]


# ---------------------------------------------------------------------------
# Params + pure-JAX f32 reference (for validation)
# ---------------------------------------------------------------------------
def init_gcn_params(key, input_dim, hidden_dim, output_dim):
    assert 2 * hidden_dim == 64, "fc expects cat of 2 nodes with hidden_dim=32 -> 64"
    ks = jax.random.split(key, 8)

    def glorot(k, fan_in, fan_out):
        lim = jnp.sqrt(6.0 / (fan_in + fan_out))
        return jax.random.uniform(k, (fan_in, fan_out), jnp.float32, -lim, lim)

    params = dict(
        w1=glorot(ks[0], input_dim, hidden_dim),
        w2=glorot(ks[1], hidden_dim, hidden_dim),
        w3=glorot(ks[2], hidden_dim, hidden_dim),
        # small random biases (instead of torch's zeros) so the bias path is tested
        b1=jax.random.uniform(ks[3], (hidden_dim,), jnp.float32, -0.1, 0.1),
        b2=jax.random.uniform(ks[4], (hidden_dim,), jnp.float32, -0.1, 0.1),
        b3=jax.random.uniform(ks[5], (hidden_dim,), jnp.float32, -0.1, 0.1),
    )
    lim = 1.0 / jnp.sqrt(64.0)
    params["fc_w"] = jax.random.uniform(ks[6], (output_dim, 64), jnp.float32, -lim, lim)
    params["fc_b"] = jax.random.uniform(ks[7], (output_dim,), jnp.float32, -lim, lim)
    return params


def gcn_reference(x, adj_norm, params):
    h = jnp.maximum(adj_norm @ (x @ params["w1"]) + params["b1"], 0.0)
    h = jnp.maximum(adj_norm @ (h @ params["w2"]) + params["b2"], 0.0)
    h = jnp.maximum(adj_norm @ (h @ params["w3"]) + params["b3"], 0.0)
    cat = jnp.concatenate([h[0], h[1]], axis=-1)              # (64,)
    return cat @ params["fc_w"].T + params["fc_b"]            # (Dout,)


# ---------------------------------------------------------------------------
if __name__ == "__main__":
    key = jax.random.PRNGKey(0)
    k_x, k_p = jax.random.split(key)

    B = 2            # batch of graphs (one pallas_call for all of them)
    N = 8            # nodes per graph (forward requires at least 2)
    input_dim = 4
    hidden_dim = 32  # fixed by Linear(64, out) and the cat of 2 nodes
    output_dim = 4

    params = init_gcn_params(k_p, input_dim, hidden_dim, output_dim)
    x = jax.random.normal(k_x, (B, N, input_dim), jnp.float32)

    # graph 0: symmetric ring; graph 1: ring plus one symmetric chord
    src = jnp.arange(N, dtype=jnp.int32)
    dst = (src + 1) % N
    ring = jnp.stack([jnp.concatenate([src, dst]),
                      jnp.concatenate([dst, src])], axis=0)          # (2, 2N)
    chord = jnp.array([[0, 4], [4, 0]], dtype=jnp.int32)
    ei0 = ring
    ei1 = jnp.concatenate([ring, chord], axis=1)

    adj0 = build_normalized_adjacency(ei0, N)
    adj1 = build_normalized_adjacency(ei1, N)
    adj_b = jnp.stack([adj0, adj1])

    # batched path (one kernel call for both graphs)
    fwd = jax.jit(lambda xb, ab: gcn_forward_batched(xb, ab, params))
    out = fwd(x, adj_b)
    jax.block_until_ready(out)
    assert out.shape == (B, output_dim)

    # validate the bf16-MXU kernel against the f32 reference
    ref = jnp.stack([gcn_reference(x[0], adj0, params),
                     gcn_reference(x[1], adj1, params)])
    max_err = float(jnp.max(jnp.abs(out - ref)))
    assert jnp.allclose(out, ref, rtol=5e-2, atol=5e-2), f"max abs err {max_err}"

    # single-graph (module-signature) path, adjacency build folded into the jit
    out_single = jax.jit(lambda xs, ei: gcn_forward(xs, ei, params))(x[0], ei0)
    jax.block_until_ready(out_single)
    assert out_single.shape == (output_dim,)

    print("KERNEL_OK")
</pallas_src>

<mosaic_0001>
module attributes {stable_mosaic.version = 11 : i64} {
  func.func @gcn_fused_kernel(%arg0: i32, %arg1: i32, %arg2: i32, %arg3: memref<1x8x8xbf16, #tpu.memory_space<vmem>>, %arg4: memref<1x8x8xbf16, #tpu.memory_space<vmem>>, %arg5: memref<1x8x4xbf16, #tpu.memory_space<vmem>>, %arg6: memref<4x32xbf16, #tpu.memory_space<vmem>>, %arg7: memref<32x32xbf16, #tpu.memory_space<vmem>>, %arg8: memref<1x1x32xf32, #tpu.memory_space<vmem>>, %arg9: memref<32x32xbf16, #tpu.memory_space<vmem>>, %arg10: memref<1x32xf32, #tpu.memory_space<vmem>>, %arg11: memref<32x4xf32, #tpu.memory_space<vmem>>, %arg12: memref<32x4xf32, #tpu.memory_space<vmem>>, %arg13: memref<1x4xf32, #tpu.memory_space<vmem>>, %arg14: memref<1x1x4xf32, #tpu.memory_space<vmem>>, %arg15: memref<8x32xbf16, #tpu.memory_space<vmem>>, %arg16: memref<8x32xf32, #tpu.memory_space<vmem>>) attributes {dimension_semantics = [#tpu.dimension_semantics<parallel>, #tpu.dimension_semantics<arbitrary>, #tpu.dimension_semantics<arbitrary>], iteration_bounds = array<i64: 2, 2, 1>, scalar_prefetch = 0 : i64, scratch_operands = 2 : i64, tpu.core_type = #tpu.core_type<tc>, window_params = [{transform_indices = @transform_0, window_bounds = array<i64: 1, 8, 8>}, {transform_indices = @transform_1, window_bounds = array<i64: 1, 8, 8>}, {transform_indices = @transform_2, window_bounds = array<i64: 1, 8, 4>}, {pipeline_mode = #tpu.pipeline_mode<synchronous>, transform_indices = @transform_3, window_bounds = array<i64: 4, 32>}, {pipeline_mode = #tpu.pipeline_mode<synchronous>, transform_indices = @transform_4, window_bounds = array<i64: 32, 32>}, {transform_indices = @transform_5, window_bounds = array<i64: 1, 1, 32>}, {pipeline_mode = #tpu.pipeline_mode<synchronous>, transform_indices = @transform_6, window_bounds = array<i64: 32, 32>}, {pipeline_mode = #tpu.pipeline_mode<synchronous>, transform_indices = @transform_7, window_bounds = array<i64: 1, 32>}, {pipeline_mode = #tpu.pipeline_mode<synchronous>, transform_indices = @transform_8, window_bounds = array<i64: 32, 4>}, {pipeline_mode = #tpu.pipeline_mode<synchronous>, transform_indices = @transform_9, window_bounds = array<i64: 32, 4>}, {pipeline_mode = #tpu.pipeline_mode<synchronous>, transform_indices = @transform_10, window_bounds = array<i64: 1, 4>}, {transform_indices = @transform_11, window_bounds = array<i64: 1, 1, 4>}]} {
    %c0_i32 = arith.constant 0 : i32
    %0 = arith.cmpi eq, %arg1, %c0_i32 : i32
    %c0_i32_0 = arith.constant 0 : i32
    %1 = arith.cmpi eq, %arg2, %c0_i32_0 : i32
    %2 = arith.andi %0, %1 : i1
    %3 = arith.extui %2 : i1 to i32
    %c0_i32_1 = arith.constant 0 : i32
    %4 = arith.cmpi ne, %3, %c0_i32_1 : i32
    scf.if %4 {
      %c0_16 = arith.constant 0 : index
      %c0_17 = arith.constant 0 : index
      %c0_18 = arith.constant 0 : index
      %29 = vector.load %arg5[%c0_16, %c0_17, %c0_18] : memref<1x8x4xbf16, #tpu.memory_space<vmem>>, vector<1x8x4xbf16>
      %30 = vector.shape_cast %29 : vector<1x8x4xbf16> to vector<8x4xbf16>
      %c0_19 = arith.constant 0 : index
      %c0_20 = arith.constant 0 : index
      %31 = vector.load %arg6[%c0_19, %c0_20] : memref<4x32xbf16, #tpu.memory_space<vmem>>, vector<4x32xbf16>
      %cst_21 = arith.constant dense<0.000000e+00> : vector<8x32xf32>
      %32 = tpu.matmul %30, %31, %cst_21 {dimension_numbers = #tpu.dot_dimension_numbers<[1], [0], [0], [1], [0, 0, 1, 1], [], []>} : vector<8x4xbf16>, vector<4x32xbf16>, vector<8x32xf32> -> vector<8x32xf32>
      %33 = arith.truncf %32 : vector<8x32xf32> to vector<8x32xbf16>
      %c0_22 = arith.constant 0 : index
      %c0_23 = arith.constant 0 : index
      %34 = vector.load %arg15[%c0_22, %c0_23] : memref<8x32xbf16, #tpu.memory_space<vmem>>, vector<8x32xbf16>
      tpu.vector_store %arg15[%c0_22, %c0_23], %33 {strides = array<i32>} : memref<8x32xbf16, #tpu.memory_space<vmem>>, vector<8x32xbf16>,
    } else {
    }
    %c0_i32_2 = arith.constant 0 : i32
    %5 = arith.cmpi sgt, %arg1, %c0_i32_2 : i32
    %c0_i32_3 = arith.constant 0 : i32
    %6 = arith.cmpi eq, %arg2, %c0_i32_3 : i32
    %7 = arith.andi %5, %6 : i1
    %8 = arith.extui %7 : i1 to i32
    %c0_i32_4 = arith.constant 0 : i32
    %9 = arith.cmpi ne, %8, %c0_i32_4 : i32
    scf.if %9 {
      %c0_16 = arith.constant 0 : index
      %c0_17 = arith.constant 0 : index
      %29 = vector.load %arg16[%c0_16, %c0_17] : memref<8x32xf32, #tpu.memory_space<vmem>>, vector<8x32xf32>
      %30 = arith.truncf %29 : vector<8x32xf32> to vector<8x32xbf16>
      %c0_18 = arith.constant 0 : index
      %c0_19 = arith.constant 0 : index
      %31 = vector.load %arg7[%c0_18, %c0_19] : memref<32x32xbf16, #tpu.memory_space<vmem>>, vector<32x32xbf16>
      %cst_20 = arith.constant dense<0.000000e+00> : vector<8x32xf32>
      %32 = tpu.matmul %30, %31, %cst_20 {dimension_numbers = #tpu.dot_dimension_numbers<[1], [0], [0], [1], [0, 0, 1, 1], [], []>} : vector<8x32xbf16>, vector<32x32xbf16>, vector<8x32xf32> -> vector<8x32xf32>
      %33 = arith.truncf %32 : vector<8x32xf32> to vector<8x32xbf16>
      %c0_21 = arith.constant 0 : index
      %c0_22 = arith.constant 0 : index
      %34 = vector.load %arg15[%c0_21, %c0_22] : memref<8x32xbf16, #tpu.memory_space<vmem>>, vector<8x32xbf16>
      tpu.vector_store %arg15[%c0_21, %c0_22], %33 {strides = array<i32>} : memref<8x32xbf16, #tpu.memory_space<vmem>>, vector<8x32xbf16>,
    } else {
    }
    %c0 = arith.constant 0 : index
    %c0_5 = arith.constant 0 : index
    %c0_6 = arith.constant 0 : index
    %10 = vector.load %arg3[%c0, %c0_5, %c0_6] : memref<1x8x8xbf16, #tpu.memory_space<vmem>>, vector<1x8x8xbf16>
    %11 = vector.shape_cast %10 : vector<1x8x8xbf16> to vector<8x8xbf16>
    %c0_7 = arith.constant 0 : index
    %c0_8 = arith.constant 0 : index
    %12 = vector.load %arg15[%c0_7, %c0_8] : memref<8x32xbf16, #tpu.memory_space<vmem>>, vector<8x32xbf16>
    %cst = arith.constant dense<0.000000e+00> : vector<8x32xf32>
    %13 = tpu.matmul %11, %12, %cst {dimension_numbers = #tpu.dot_dimension_numbers<[1], [0], [0], [1], [0, 0, 1, 1], [], []>} : vector<8x8xbf16>, vector<8x32xbf16>, vector<8x32xf32> -> vector<8x32xf32>
    %c8_i32 = arith.constant 8 : i32
    %14 = arith.muli %arg2, %c8_i32 : i32
    %15 = tpu.assume_multiple %14, 8 : i32
    %c0_9 = arith.constant 0 : index
    %c0_10 = arith.constant 0 : index
    %c0_11 = arith.constant 0 : index
    %16 = vector.load %arg8[%c0_9, %c0_10, %c0_11] : memref<1x1x32xf32, #tpu.memory_space<vmem>>, vector<1x1x32xf32>
    %17 = vector.shape_cast %16 : vector<1x1x32xf32> to vector<1x32xf32>
    %18 = vector.broadcast %17 : vector<1x32xf32> to vector<8x32xf32>
    %19 = arith.addf %13, %18 : vector<8x32xf32>
    %cst_12 = arith.constant 0.000000e+00 : f32
    %20 = vector.broadcast %cst_12 : f32 to vector<8x32xf32>
    %21 = arith.maximumf %19, %20 : vector<8x32xf32>
    %22 = arith.index_cast %15 : i32 to index
    %c0_13 = arith.constant 0 : index
    %23 = vector.load %arg16[%22, %c0_13] : memref<8x32xf32, #tpu.memory_space<vmem>>, vector<8x32xf32>
    tpu.vector_store %arg16[%22, %c0_13], %21 {strides = array<i32>} : memref<8x32xf32, #tpu.memory_space<vmem>>, vector<8x32xf32>,
    %c1_i32 = arith.constant 1 : i32
    %24 = arith.cmpi eq, %arg1, %c1_i32 : i32
    %c0_i32_14 = arith.constant 0 : i32
    %25 = arith.cmpi eq, %arg2, %c0_i32_14 : i32
    %26 = arith.andi %24, %25 : i1
    %27 = arith.extui %26 : i1 to i32
    %c0_i32_15 = arith.constant 0 : i32
    %28 = arith.cmpi ne, %27, %c0_i32_15 : i32
    scf.if %28 {
      %c0_16 = arith.constant 0 : index
      %c0_17 = arith.constant 0 : index
      %29 = vector.load %arg16[%c0_16, %c0_17] : memref<8x32xf32, #tpu.memory_space<vmem>>, vector<8x32xf32>
      %30 = arith.truncf %29 : vector<8x32xf32> to vector<8x32xbf16>
      %c0_18 = arith.constant 0 : index
      %c0_19 = arith.constant 0 : index
      %31 = vector.load %arg9[%c0_18, %c0_19] : memref<32x32xbf16, #tpu.memory_space<vmem>>, vector<32x32xbf16>
      %cst_20 = arith.constant dense<0.000000e+00> : vector<8x32xf32>
      %32 = tpu.matmul %30, %31, %cst_20 {dimension_numbers = #tpu.dot_dimension_numbers<[1], [0], [0], [1], [0, 0, 1, 1], [], []>} : vector<8x32xbf16>, vector<32x32xbf16>, vector<8x32xf32> -> vector<8x32xf32>
      %c0_21 = arith.constant 0 : index
      %c0_22 = arith.constant 0 : index
      %c0_23 = arith.constant 0 : index
      %33 = vector.load %arg4[%c0_21, %c0_22, %c0_23] : memref<1x8x8xbf16, #tpu.memory_space<vmem>>, vector<1x8x8xbf16>
      %34 = vector.shape_cast %33 : vector<1x8x8xbf16> to vector<8x8xbf16>
      %35 = arith.truncf %32 : vector<8x32xf32> to vector<8x32xbf16>
      %cst_24 = arith.constant dense<0.000000e+00> : vector<8x32xf32>
      %36 = tpu.matmul %34, %35, %cst_24 {dimension_numbers = #tpu.dot_dimension_numbers<[1], [0], [0], [1], [0, 0, 1, 1], [], []>} : vector<8x8xbf16>, vector<8x32xbf16>, vector<8x32xf32> -> vector<8x32xf32>
      %c0_25 = arith.constant 0 : index
      %c0_26 = arith.constant 0 : index
      %37 = vector.load %arg10[%c0_25, %c0_26] : memref<1x32xf32, #tpu.memory_space<vmem>>, vector<1x32xf32>
      %38 = vector.broadcast %37 : vector<1x32xf32> to vector<8x32xf32>
      %39 = arith.addf %36, %38 : vector<8x32xf32>
      %cst_27 = arith.constant 0.000000e+00 : f32
      %40 = vector.broadcast %cst_27 : f32 to vector<8x32xf32>
      %41 = arith.maximumf %39, %40 : vector<8x32xf32>
      %42 = vector.extract_strided_slice %41 {offsets = [0, 0], sizes = [1, 32], strides = [1, 1]} : vector<8x32xf32> to vector<1x32xf32>
      %c0_28 = arith.constant 0 : index
      %c0_29 = arith.constant 0 : index
      %43 = vector.load %arg11[%c0_28, %c0_29] : memref<32x4xf32, #tpu.memory_space<vmem>>, vector<32x4xf32>
      %cst_30 = arith.constant dense<0.000000e+00> : vector<1x4xf32>
      %44 = tpu.matmul %42, %43, %cst_30 {dimension_numbers = #tpu.dot_dimension_numbers<[1], [0], [0], [1], [0, 0, 1, 1], [], []>} : vector<1x32xf32>, vector<32x4xf32>, vector<1x4xf32> -> vector<1x4xf32>
      %45 = vector.extract_strided_slice %41 {offsets = [1, 0], sizes = [1, 32], strides = [1, 1]} : vector<8x32xf32> to vector<1x32xf32>
      %c0_31 = arith.constant 0 : index
      %c0_32 = arith.constant 0 : index
      %46 = vector.load %arg12[%c0_31, %c0_32] : memref<32x4xf32, #tpu.memory_space<vmem>>, vector<32x4xf32>
      %cst_33 = arith.constant dense<0.000000e+00> : vector<1x4xf32>
      %47 = tpu.matmul %45, %46, %cst_33 {dimension_numbers = #tpu.dot_dimension_numbers<[1], [0], [0], [1], [0, 0, 1, 1], [], []>} : vector<1x32xf32>, vector<32x4xf32>, vector<1x4xf32> -> vector<1x4xf32>
      %48 = arith.addf %44, %47 : vector<1x4xf32>
      %c0_34 = arith.constant 0 : index
      %c0_35 = arith.constant 0 : index
      %49 = vector.load %arg13[%c0_34, %c0_35] : memref<1x4xf32, #tpu.memory_space<vmem>>, vector<1x4xf32>
      %50 = arith.addf %48, %49 : vector<1x4xf32>
      %51 = vector.shape_cast %50 : vector<1x4xf32> to vector<1x1x4xf32>
      %c0_36 = arith.constant 0 : index
      %c0_37 = arith.constant 0 : index
      %c0_38 = arith.constant 0 : index
      %52 = vector.load %arg14[%c0_36, %c0_37, %c0_38] : memref<1x1x4xf32, #tpu.memory_space<vmem>>, vector<1x1x4xf32>
      tpu.vector_store %arg14[%c0_36, %c0_37, %c0_38], %51 {strides = array<i32>} : memref<1x1x4xf32, #tpu.memory_space<vmem>>, vector<1x1x4xf32>,
    } else {
    }
    return
  }
  func.func @transform_0(%arg0: i32, %arg1: i32, %arg2: i32) -> (i32, i32, i32) {
    %c0_i32 = arith.constant 0 : i32
    %c0_i32_0 = arith.constant 0 : i32
    return %arg0, %arg2, %c0_i32 : i32, i32, i32
  }
  func.func @transform_1(%arg0: i32, %arg1: i32, %arg2: i32) -> (i32, i32, i32) {
    %c0_i32 = arith.constant 0 : i32
    %c0_i32_0 = arith.constant 0 : i32
    %c0_i32_1 = arith.constant 0 : i32
    return %arg0, %c0_i32, %c0_i32_0 : i32, i32, i32
  }
  func.func @transform_2(%arg0: i32, %arg1: i32, %arg2: i32) -> (i32, i32, i32) {
    %c0_i32 = arith.constant 0 : i32
    %c0_i32_0 = arith.constant 0 : i32
    %c0_i32_1 = arith.constant 0 : i32
    return %arg0, %c0_i32, %c0_i32_0 : i32, i32, i32
  }
  func.func @transform_3(%arg0: i32, %arg1: i32, %arg2: i32) -> (i32, i32) {
    %c0_i32 = arith.constant 0 : i32
    %c0_i32_0 = arith.constant 0 : i32
    %c0_i32_1 = arith.constant 0 : i32
    return %c0_i32, %c0_i32_0 : i32, i32
  }
  func.func @transform_4(%arg0: i32, %arg1: i32, %arg2: i32) -> (i32, i32) {
    %c0_i32 = arith.constant 0 : i32
    %c0_i32_0 = arith.constant 0 : i32
    %c0_i32_1 = arith.constant 0 : i32
    return %c0_i32, %c0_i32_0 : i32, i32
  }
  func.func @transform_5(%arg0: i32, %arg1: i32, %arg2: i32) -> (i32, i32, i32) {
    %c0_i32 = arith.constant 0 : i32
    %c0_i32_0 = arith.constant 0 : i32
    %c0_i32_1 = arith.constant 0 : i32
    return %arg1, %c0_i32, %c0_i32_0 : i32, i32, i32
  }
  func.func @transform_6(%arg0: i32, %arg1: i32, %arg2: i32) -> (i32, i32) {
    %c0_i32 = arith.constant 0 : i32
    %c0_i32_0 = arith.constant 0 : i32
    %c0_i32_1 = arith.constant 0 : i32
    return %c0_i32, %c0_i32_0 : i32, i32
  }
  func.func @transform_7(%arg0: i32, %arg1: i32, %arg2: i32) -> (i32, i32) {
    %c0_i32 = arith.constant 0 : i32
    %c0_i32_0 = arith.constant 0 : i32
    %c0_i32_1 = arith.constant 0 : i32
    return %c0_i32, %c0_i32_0 : i32, i32
  }
  func.func @transform_8(%arg0: i32, %arg1: i32, %arg2: i32) -> (i32, i32) {
    %c0_i32 = arith.constant 0 : i32
    %c0_i32_0 = arith.constant 0 : i32
    %c0_i32_1 = arith.constant 0 : i32
    return %c0_i32, %c0_i32_0 : i32, i32
  }
  func.func @transform_9(%arg0: i32, %arg1: i32, %arg2: i32) -> (i32, i32) {
    %c0_i32 = arith.constant 0 : i32
    %c0_i32_0 = arith.constant 0 : i32
    %c0_i32_1 = arith.constant 0 : i32
    return %c0_i32, %c0_i32_0 : i32, i32
  }
  func.func @transform_10(%arg0: i32, %arg1: i32, %arg2: i32) -> (i32, i32) {
    %c0_i32 = arith.constant 0 : i32
    %c0_i32_0 = arith.constant 0 : i32
    %c0_i32_1 = arith.constant 0 : i32
    return %c0_i32, %c0_i32_0 : i32, i32
  }
  func.func @transform_11(%arg0: i32, %arg1: i32, %arg2: i32) -> (i32, i32, i32) {
    %c0_i32 = arith.constant 0 : i32
    %c0_i32_0 = arith.constant 0 : i32
    %c0_i32_1 = arith.constant 0 : i32
    return %arg0, %c0_i32, %c0_i32_0 : i32, i32, i32
  }
}

</mosaic_0001>

<llo_original>
// kernel: _lambda_.1
$region0: #{_lambda_.1}
  #allocation0 [shape = 'u32[]', space=smem, size = 0x4, offset = 0x4, fixed_abs, tag = 'smem constant byte address 0x4 - core index']
  #allocation1 [shape = 'u32[144,128]{1,0:T(1,128)}', space=vmem, size = 0x12000, scoped, tag = 'internal scratch']
  #allocation2 [shape = 'bf16[8,32]{1,0:T(8,128)(2,1)}', space=vmem, size = 0x800, scoped, tag = 'scratch operand']
  #allocation3 [shape = 'f32[8,32]{1,0:T(8,128)}', space=vmem, size = 0x1000, scoped, tag = 'scratch operand']
  %s0 = inlined_call_operand.vmem [shape: bf16[2,8,8], index: 0, kind: input, shape index: {}, may-alias: {0,1}]
  %s1 = inlined_call_operand.vmem [shape: bf16[2,8,8], index: 1, kind: input, shape index: {}, may-alias: {0,1}]
  %s2 = inlined_call_operand.vmem [shape: bf16[2,8,4], index: 2, kind: input, shape index: {}]
  %s3 = inlined_call_operand.vmem [shape: bf16[4,32], index: 3, kind: input, shape index: {}]
  %s4 = inlined_call_operand.vmem [shape: bf16[32,32], index: 4, kind: input, shape index: {}]
  %s5 = inlined_call_operand.vmem [shape: f32[2,1,32], index: 5, kind: input, shape index: {}]
  %s6 = inlined_call_operand.hbm [shape: bf16[32,32], index: 6, kind: input, shape index: {}]
  %s7 = inlined_call_operand.vmem [shape: f32[1,32], index: 7, kind: input, shape index: {}]
  %s8 = inlined_call_operand.vmem [shape: f32[32,4], index: 8, kind: input, shape index: {}]
  %s9 = inlined_call_operand.hbm [shape: f32[32,4], index: 9, kind: input, shape index: {}]
  %s10 = inlined_call_operand.vmem [shape: f32[1,4], index: 10, kind: input, shape index: {}]
  %s11 = inlined_call_operand.hbm [shape: f32[2,1,4], index: 11, kind: output, shape index: {}]
  %s12 = sld [smem:[#allocation0]]
  $region97: #{_lambda_.1} parent=0
    _
  %s14 = ssub.s32 1, %s12
  %s15 = scalar_select 0, %s14, %s12
  $region1: #{_lambda_.1} parent=0
    #allocation4 [shape = 'u8[8192]{0}', space=vmem, size = 0x2000, scoped, tag = 'input window, operand 6, single buffered']
    #allocation5 [shape = 's32[2]{0}', space=sflag, size = 0x8, scoped, tag = 'scoped memory for _lambda_.1']
    #allocation6 [shape = 's32[2]{0}', space=sflag, size = 0x8, scoped, tag = 'scoped memory for _lambda_.1']
    #allocation7 [shape = 'u8[16384]{0}', space=vmem, size = 0x4000, scoped, tag = 'input window, operand 9, single buffered']
    #allocation8 [shape = 's32[1]{0}', space=sflag, size = 0x4, scoped, tag = 'scoped memory for _lambda_.1']
    #allocation9 [shape = 'u8[1024]{0}', space=vmem, size = 0x400, scoped, tag = 'output window, operand 0']
    %16 = vsyncpa [#allocation5], 0
    %17 = vsyncpa [#allocation8], 0
    %18 = vsyncpa [#allocation6], 0
    %s19 = scalar_lea.sflag [#allocation6], 1
    %20 = vsyncpa %s19, 0
    loop: start=0, step=1, limit=6
    $region2: #{_lambda_.1} parent=1 // loop_pre_header
      _
    $region3: #{_lambda_.1} parent=1 // loop_header
      %s22 = sphi 0, %s26
      %p23 = scmp.ge.s32.totalorder %s22, 6
      %s29 = sphi 0, %s48
      %s30 = sphi 0, %s44
      %s31 = sphi 0, %s40
      %s32 = sphi 0, %s29
      %s33 = sphi 0, %s30
      %s34 = sphi 0, %s31
      %s35 = sphi 0, %s32
      %s36 = sphi 0, %s33
      %s37 = sphi 0, %s34
      %s53 = sphi 0, %s55
      %s56 = sphi 0, %s53
      %s57 = sphi 0, %s56
      %s73 = sphi 0, %s57
      %s79 = sphi 0, %s81
      %s82 = sphi 0, %s79
      %s83 = sphi 0, %s82
      %s99 = sphi 0, %s83
      %s105 = sphi 0, %s107
      %s108 = sphi 0, %s105
      %s109 = sphi 0, %s108
      %s125 = sphi 0, %s109
      %s129 = sphi 0, %s129
      %s131 = sphi 0, %s129
      %s132 = sphi 0, %s131
      %s146 = sphi 0, %s132
      %s150 = sphi 0, %s150
      %s152 = sphi 0, %s150
      %s153 = sphi 0, %s152
      %s167 = sphi 0, %s153
      %s173 = sphi 0, %s175
      %s176 = sphi 0, %s173
      %s177 = sphi 0, %s176
      %s193 = sphi 0, %s177
      %s197 = sphi 0, %s197
      %s199 = sphi 0, %s197
      %s200 = sphi 0, %s199
      %s214 = sphi 0, %s200
      %s218 = sphi 0, %s218
      %s220 = sphi 0, %s218
      %s221 = sphi 0, %s220
      %s235 = sphi 0, %s221
      %s239 = sphi 0, %s239
      %s241 = sphi 0, %s239
      %s242 = sphi 0, %s241
      %s256 = sphi 0, %s242
      %s260 = sphi 0, %s260
      %s262 = sphi 0, %s260
      %s263 = sphi 0, %s262
      %s277 = sphi 0, %s263
      %s281 = sphi 0, %s281
      %s283 = sphi 0, %s281
      %s284 = sphi 0, %s283
      %s298 = sphi 0, %s284
      %s304 = sphi 0, %s306
      %s307 = sphi 0, %s304
      %s308 = sphi 0, %s307
      %s324 = sphi 0, %s308
    $region4: #{_lambda_.1} parent=1 // loop_header_branch
      %25 = sbr.rel (%p23) target = $region8
    $region5: #{_lambda_.1} parent=1 // loop_body
      %s27 = ssub.s32 %s22, 1
      %s28 = ssub.s32 %s22, 2
      %s38 = sadd.s32 1, %s31
      %p39 = scmp.ge.s32.totalorder %s38, 1
      %s40 = scalar_select %p39, 0, %s38
      %s41 = sadd.s32 1, %s30
      %s42 = scalar_select %p39, %s41, %s30
      %p43 = scmp.ge.s32.totalorder %s42, 2
      %s44 = scalar_select %p43, 0, %s42
      %s45 = sadd.s32 1, %s29
      %s46 = scalar_select %p43, %s45, %s29
      %p47 = scmp.ge.s32.totalorder %s46, 2
      %s48 = scalar_select %p47, 0, %s46
      %s49 = ssub.s32 %s29, %s48
      %s50 = ssub.s32 %s31, %s40
      %s51 = sor.u32 %s49, %s50
      %p52 = scmp.eq.s32.totalorder %s51, 0
      %s54 = sadd.s32 %s53, 1
      %s55 = scalar_select %p52, %s53, %s54
      %p58 = pneg %p52
      %p59 = scmp.eq.s32.totalorder %s22, 3
      %p60 = por %p58, %p59
      %p61 = scmp.ne.s32.totalorder %s53, %s56
      %p62 = scmp.eq.s32.totalorder %s22, 0
      %p63 = por %p61, %p62
      %p64 = scmp.ne.s32.totalorder %s53, %s56
      %p65 = scmp.eq.s32.totalorder %s27, 3
      %p66 = por %p64, %p65
      %p67 = scmp.ne.s32.totalorder %s56, %s57
      %p68 = scmp.eq.s32.totalorder %s27, 0
      %p69 = por %p67, %p68
      %p70 = scmp.ne.s32.totalorder %s56, %s57
      %p71 = scmp.eq.s32.totalorder %s28, 3
      %p72 = por %p70, %p71
      %p74 = scmp.ne.s32.totalorder %s57, %s73
      %p75 = scmp.eq.s32.totalorder %s28, 0
      %p76 = por %p74, %p75
      %s77 = ssub.s32 %s29, %s48
      %p78 = scmp.eq.s32.totalorder %s77, 0
      %s80 = sadd.s32 %s79, 1
      %s81 = scalar_select %p78, %s79, %s80
      %p84 = pneg %p78
      %p85 = scmp.eq.s32.totalorder %s22, 3
      %p86 = por %p84, %p85
      %p87 = scmp.ne.s32.totalorder %s79, %s82
      %p88 = scmp.eq.s32.totalorder %s22, 0
      %p89 = por %p87, %p88
      %p90 = scmp.ne.s32.totalorder %s79, %s82
      %p91 = scmp.eq.s32.totalorder %s27, 3
      %p92 = por %p90, %p91
      %p93 = scmp.ne.s32.totalorder %s82, %s83
      %p94 = scmp.eq.s32.totalorder %s27, 0
      %p95 = por %p93, %p94
      %p96 = scmp.ne.s32.totalorder %s82, %s83
      %p97 = scmp.eq.s32.totalorder %s28, 3
      %p98 = por %p96, %p97
      %p100 = scmp.ne.s32.totalorder %s83, %s99
      %p101 = scmp.eq.s32.totalorder %s28, 0
      %p102 = por %p100, %p101
      %s103 = ssub.s32 %s29, %s48
      %p104 = scmp.eq.s32.totalorder %s103, 0
      %s106 = sadd.s32 %s105, 1
      %s107 = scalar_select %p104, %s105, %s106
      %p110 = pneg %p104
      %p111 = scmp.eq.s32.totalorder %s22, 3
      %p112 = por %p110, %p111
      %p113 = scmp.ne.s32.totalorder %s105, %s108
      %p114 = scmp.eq.s32.totalorder %s22, 0
      %p115 = por %p113, %p114
      %p116 = scmp.ne.s32.totalorder %s105, %s108
      %p117 = scmp.eq.s32.totalorder %s27, 3
      %p118 = por %p116, %p117
      %p119 = scmp.ne.s32.totalorder %s108, %s109
      %p120 = scmp.eq.s32.totalorder %s27, 0
      %p121 = por %p119, %p120
      %p122 = scmp.ne.s32.totalorder %s108, %s109
      %p123 = scmp.eq.s32.totalorder %s28, 3
      %p124 = por %p122, %p123
      %p126 = scmp.ne.s32.totalorder %s109, %s125
      %p127 = scmp.eq.s32.totalorder %s28, 0
      %p128 = por %p126, %p127
      %s130 = sadd.s32 %s129, 1
      %p133 = scmp.eq.s32.totalorder %s22, 3
      %p134 = scmp.ne.s32.totalorder %s129, %s131
      %p135 = scmp.eq.s32.totalorder %s22, 0
      %p136 = por %p134, %p135
      %p137 = scmp.ne.s32.totalorder %s129, %s131
      %p138 = scmp.eq.s32.totalorder %s27, 3
      %p139 = por %p137, %p138
      %p140 = scmp.ne.s32.totalorder %s131, %s132
      %p141 = scmp.eq.s32.totalorder %s27, 0
      %p142 = por %p140, %p141
      %p143 = scmp.ne.s32.totalorder %s131, %s132
      %p144 = scmp.eq.s32.totalorder %s28, 3
      %p145 = por %p143, %p144
      %p147 = scmp.ne.s32.totalorder %s132, %s146
      %p148 = scmp.eq.s32.totalorder %s28, 0
      %p149 = por %p147, %p148
      %s151 = sadd.s32 %s150, 1
      %p154 = scmp.eq.s32.totalorder %s22, 3
      %p155 = scmp.ne.s32.totalorder %s150, %s152
      %p156 = scmp.eq.s32.totalorder %s22, 0
      %p157 = por %p155, %p156
      %p158 = scmp.ne.s32.totalorder %s150, %s152
      %p159 = scmp.eq.s32.totalorder %s27, 3
      %p160 = por %p158, %p159
      %p161 = scmp.ne.s32.totalorder %s152, %s153
      %p162 = scmp.eq.s32.totalorder %s27, 0
      %p163 = por %p161, %p162
      %p164 = scmp.ne.s32.totalorder %s152, %s153
      %p165 = scmp.eq.s32.totalorder %s28, 3
      %p166 = por %p164, %p165
      %p168 = scmp.ne.s32.totalorder %s153, %s167
      %p169 = scmp.eq.s32.totalorder %s28, 0
      %p170 = por %p168, %p169
      %s171 = ssub.s32 %s30, %s44
      %p172 = scmp.eq.s32.totalorder %s171, 0
      %s174 = sadd.s32 %s173, 1
      %s175 = scalar_select %p172, %s173, %s174
      %p178 = pneg %p172
      %p179 = scmp.eq.s32.totalorder %s22, 3
      %p180 = por %p178, %p179
      %p181 = scmp.ne.s32.totalorder %s173, %s176
      %p182 = scmp.eq.s32.totalorder %s22, 0
      %p183 = por %p181, %p182
      %p184 = scmp.ne.s32.totalorder %s173, %s176
      %p185 = scmp.eq.s32.totalorder %s27, 3
      %p186 = por %p184, %p185
      %p187 = scmp.ne.s32.totalorder %s176, %s177
      %p188 = scmp.eq.s32.totalorder %s27, 0
      %p189 = por %p187, %p188
      %p190 = scmp.ne.s32.totalorder %s176, %s177
      %p191 = scmp.eq.s32.totalorder %s28, 3
      %p192 = por %p190, %p191
      %p194 = scmp.ne.s32.totalorder %s177, %s193
      %p195 = scmp.eq.s32.totalorder %s28, 0
      %p196 = por %p194, %p195
      %s198 = sadd.s32 %s197, 1
      %p201 = scmp.eq.s32.totalorder %s22, 3
      %p202 = scmp.ne.s32.totalorder %s197, %s199
      %p203 = scmp.eq.s32.totalorder %s22, 0
      %p204 = por %p202, %p203
      %p205 = scmp.ne.s32.totalorder %s197, %s199
      %p206 = scmp.eq.s32.totalorder %s27, 3
      %p207 = por %p205, %p206
      %p208 = scmp.ne.s32.totalorder %s199, %s200
      %p209 = scmp.eq.s32.totalorder %s27, 0
      %p210 = por %p208, %p209
      %p211 = scmp.ne.s32.totalorder %s199, %s200
      %p212 = scmp.eq.s32.totalorder %s28, 3
      %p213 = por %p211, %p212
      %p215 = scmp.ne.s32.totalorder %s200, %s214
      %p216 = scmp.eq.s32.totalorder %s28, 0
      %p217 = por %p215, %p216
      %s219 = sadd.s32 %s218, 1
      %p222 = scmp.eq.s32.totalorder %s22, 3
      %p223 = scmp.ne.s32.totalorder %s218, %s220
      %p224 = scmp.eq.s32.totalorder %s22, 0
      %p225 = por %p223, %p224
      %p226 = scmp.ne.s32.totalorder %s218, %s220
      %p227 = scmp.eq.s32.totalorder %s27, 3
      %p228 = por %p226, %p227
      %p229 = scmp.ne.s32.totalorder %s220, %s221
      %p230 = scmp.eq.s32.totalorder %s27, 0
      %p231 = por %p229, %p230
      %p232 = scmp.ne.s32.totalorder %s220, %s221
      %p233 = scmp.eq.s32.totalorder %s28, 3
      %p234 = por %p232, %p233
      %p236 = scmp.ne.s32.totalorder %s221, %s235
      %p237 = scmp.eq.s32.totalorder %s28, 0
      %p238 = por %p236, %p237
      %s240 = sadd.s32 %s239, 1
      %p243 = scmp.eq.s32.totalorder %s22, 3
      %p244 = scmp.ne.s32.totalorder %s239, %s241
      %p245 = scmp.eq.s32.totalorder %s22, 0
      %p246 = por %p244, %p245
      %p247 = scmp.ne.s32.totalorder %s239, %s241
      %p248 = scmp.eq.s32.totalorder %s27, 3
      %p249 = por %p247, %p248
      %p250 = scmp.ne.s32.totalorder %s241, %s242
      %p251 = scmp.eq.s32.totalorder %s27, 0
      %p252 = por %p250, %p251
      %p253 = scmp.ne.s32.totalorder %s241, %s242
      %p254 = scmp.eq.s32.totalorder %s28, 3
      %p255 = por %p253, %p254
      %p257 = scmp.ne.s32.totalorder %s242, %s256
      %p258 = scmp.eq.s32.totalorder %s28, 0
      %p259 = por %p257, %p258
      %s261 = sadd.s32 %s260, 1
      %p264 = scmp.eq.s32.totalorder %s22, 3
      %p265 = scmp.ne.s32.totalorder %s260, %s262
      %p266 = scmp.eq.s32.totalorder %s22, 0
      %p267 = por %p265, %p266
      %p268 = scmp.ne.s32.totalorder %s260, %s262
      %p269 = scmp.eq.s32.totalorder %s27, 3
      %p270 = por %p268, %p269
      %p271 = scmp.ne.s32.totalorder %s262, %s263
      %p272 = scmp.eq.s32.totalorder %s27, 0
      %p273 = por %p271, %p272
      %p274 = scmp.ne.s32.totalorder %s262, %s263
      %p275 = scmp.eq.s32.totalorder %s28, 3
      %p276 = por %p274, %p275
      %p278 = scmp.ne.s32.totalorder %s263, %s277
      %p279 = scmp.eq.s32.totalorder %s28, 0
      %p280 = por %p278, %p279
      %s282 = sadd.s32 %s281, 1
      %p285 = scmp.eq.s32.totalorder %s22, 3
      %p286 = scmp.ne.s32.totalorder %s281, %s283
      %p287 = scmp.eq.s32.totalorder %s22, 0
      %p288 = por %p286, %p287
      %p289 = scmp.ne.s32.totalorder %s281, %s283
      %p290 = scmp.eq.s32.totalorder %s27, 3
      %p291 = por %p289, %p290
      %p292 = scmp.ne.s32.totalorder %s283, %s284
      %p293 = scmp.eq.s32.totalorder %s27, 0
      %p294 = por %p292, %p293
      %p295 = scmp.ne.s32.totalorder %s283, %s284
      %p296 = scmp.eq.s32.totalorder %s28, 3
      %p297 = por %p295, %p296
      %p299 = scmp.ne.s32.totalorder %s284, %s298
      %p300 = scmp.eq.s32.totalorder %s28, 0
      %p301 = por %p299, %p300
      %s302 = ssub.s32 %s29, %s48
      %p303 = scmp.eq.s32.totalorder %s302, 0
      %s305 = sadd.s32 %s304, 1
      %s306 = scalar_select %p303, %s304, %s305
      %p309 = pneg %p303
      %p310 = scmp.eq.s32.totalorder %s22, 3
      %p311 = por %p309, %p310
      %p312 = scmp.ne.s32.totalorder %s304, %s307
      %p313 = scmp.eq.s32.totalorder %s22, 0
      %p314 = por %p312, %p313
      %p315 = scmp.ne.s32.totalorder %s304, %s307
      %p316 = scmp.eq.s32.totalorder %s27, 3
      %p317 = por %p315, %p316
      %p318 = scmp.ne.s32.totalorder %s307, %s308
      %p319 = scmp.eq.s32.totalorder %s27, 0
      %p320 = por %p318, %p319
      %p321 = scmp.ne.s32.totalorder %s307, %s308
      %p322 = scmp.eq.s32.totalorder %s28, 3
      %p323 = por %p321, %p322
      %p325 = scmp.ne.s32.totalorder %s308, %s324
      %p326 = scmp.eq.s32.totalorder %s28, 0
      %p327 = por %p325, %p326
      %p328 = scmp.le.s32.totalorder 1, %s22
      %p329 = scmp.lt.s32.totalorder %s22, 5
      %p330 = pnand %p328, %p329
      %p331 = pneg %p330
      // Predicated region
      $region9: #{_lambda_.1} parent=5 // pred_check
        _
      $region10: #{_lambda_.1} parent=5 // pred_check_branch
        %333 = sbr.rel (%p330) target = $region12
      $region11: #{_lambda_.1} parent=5 // pred_region
        %s334 = ssub.s32 %s22, 1
        // Predicated region
        $region13: #{_lambda_.1} parent=11 // pred_check
          %p335 = pneg %p142
        $region14: #{_lambda_.1} parent=11 // pred_check_branch
          %337 = sbr.rel (%p335) target = $region16
        $region15: #{_lambda_.1} parent=11 // pred_region
          _
        $region16: #{_lambda_.1} parent=11 // pred_fallthru
          _
        // Predicated region
        $region17: #{_lambda_.1} parent=11 // pred_check
          %p338 = pneg %p163
        $region18: #{_lambda_.1} parent=11 // pred_check_branch
          %340 = sbr.rel (%p338) target = $region20
        $region19: #{_lambda_.1} parent=11 // pred_region
          _
        $region20: #{_lambda_.1} parent=11 // pred_fallthru
          _
        // Predicated region
        $region21: #{_lambda_.1} parent=11 // pred_check
          %p341 = pneg %p210
        $region22: #{_lambda_.1} parent=11 // pred_check_branch
          %343 = sbr.rel (%p341) target = $region24
        $region23: #{_lambda_.1} parent=11 // pred_region
          %s345 = ssub.s32 256, 256
          %346 = vsyncadd [#allocation5], %s345
          %s347 = sshll.u32 [#allocation4], 4
          %s348 = int_to_ptr.vmem [resolvable:$true] %s347
          %353 = dma.hbm_to_vmem [thread:$0]  %s6, 256, %s348, [#allocation5], 64, 64, 4
        $region24: #{_lambda_.1} parent=11 // pred_fallthru
          _
        // Predicated region
        $region25: #{_lambda_.1} parent=11 // pred_check
          %p354 = pneg %p231
        $region26: #{_lambda_.1} parent=11 // pred_check_branch
          %356 = sbr.rel (%p354) target = $region28
        $region27: #{_lambda_.1} parent=11 // pred_region
          _
        $region28: #{_lambda_.1} parent=11 // pred_fallthru
          _
        // Predicated region
        $region29: #{_lambda_.1} parent=11 // pred_check
          %p357 = pneg %p252
        $region30: #{_lambda_.1} parent=11 // pred_check_branch
          %359 = sbr.rel (%p357) target = $region32
        $region31: #{_lambda_.1} parent=11 // pred_region
          _
        $region32: #{_lambda_.1} parent=11 // pred_fallthru
          _
        // Predicated region
        $region33: #{_lambda_.1} parent=11 // pred_check
          %p360 = pneg %p273
        $region34: #{_lambda_.1} parent=11 // pred_check_branch
          %362 = sbr.rel (%p360) target = $region36
        $region35: #{_lambda_.1} parent=11 // pred_region
          %s364 = ssub.s32 512, 512
          %365 = vsyncadd [#allocation8], %s364
          %s366 = sshll.u32 [#allocation7], 4
          %s367 = int_to_ptr.vmem [resolvable:$true] %s366
          %372 = dma.hbm_to_vmem [thread:$0]  %s9, 512, %s367, [#allocation8], 128, 128, 8
        $region36: #{_lambda_.1} parent=11 // pred_fallthru
          _
        // Predicated region
        $region37: #{_lambda_.1} parent=11 // pred_check
          %p373 = pneg %p294
        $region38: #{_lambda_.1} parent=11 // pred_check_branch
          %375 = sbr.rel (%p373) target = $region40
        $region39: #{_lambda_.1} parent=11 // pred_region
          _
        $region40: #{_lambda_.1} parent=11 // pred_fallthru
          _
      $region12: #{_lambda_.1} parent=5 // pred_fallthru
        _
      %p376 = scmp.lt.s32.totalorder %s22, 4
      // Predicated region
      $region41: #{_lambda_.1} parent=5 // pred_check
        %p377 = pneg %p376
      $region42: #{_lambda_.1} parent=5 // pred_check_branch
        %379 = sbr.rel (%p377) target = $region44
      $region43: #{_lambda_.1} parent=5 // pred_region
        // Predicated region
        $region45: #{_lambda_.1} parent=43 // pred_check
          %p380 = pneg %p63
        $region46: #{_lambda_.1} parent=43 // pred_check_branch
          %382 = sbr.rel (%p380) target = $region48
        $region47: #{_lambda_.1} parent=43 // pred_region
          %p383 = scmp.lt.s32.totalorder %s29, 1
          %s384 = scalar_select %p383, %s29, 1
          %p385 = scmp.lt.s32.totalorder %s31, 0
          %s386 = scalar_select %p385, %s31, 0
          %s387 = sadd.s32 %s386, %s384
          %s388 = smul.addr %s387, 4
          %s389 = scalar_lea.vmem %s0, %s388
        $region48: #{_lambda_.1} parent=43 // pred_fallthru
          _
        // Predicated region
        $region49: #{_lambda_.1} parent=43 // pred_check
          %p390 = pneg %p89
        $region50: #{_lambda_.1} parent=43 // pred_check_branch
          %392 = sbr.rel (%p390) target = $region52
        $region51: #{_lambda_.1} parent=43 // pred_region
          %p393 = scmp.lt.s32.totalorder %s29, 1
          %s394 = scalar_select %p393, %s29, 1
          %s395 = smul.addr %s394, 4
          %s396 = scalar_lea.vmem %s1, %s395
        $region52: #{_lambda_.1} parent=43 // pred_fallthru
          _
        // Predicated region
        $region53: #{_lambda_.1} parent=43 // pred_check
          %p397 = pneg %p115
        $region54: #{_lambda_.1} parent=43 // pred_check_branch
          %399 = sbr.rel (%p397) target = $region56
        $region55: #{_lambda_.1} parent=43 // pred_region
          %p400 = scmp.lt.s32.totalorder %s29, 1
          %s401 = scalar_select %p400, %s29, 1
          %s402 = smul.addr %s401, 4
          %s403 = scalar_lea.vmem %s2, %s402
        $region56: #{_lambda_.1} parent=43 // pred_fallthru
          _
        // Predicated region
        $region57: #{_lambda_.1} parent=43 // pred_check
          %p404 = pneg %p183
        $region58: #{_lambda_.1} parent=43 // pred_check_branch
          %406 = sbr.rel (%p404) target = $region60
        $region59: #{_lambda_.1} parent=43 // pred_region
          %p407 = scmp.lt.s32.totalorder %s30, 1
          %s408 = scalar_select %p407, %s30, 1
          %s409 = scalar_lea.vmem %s5, %s408
        $region60: #{_lambda_.1} parent=43 // pred_fallthru
          _
      $region44: #{_lambda_.1} parent=5 // pred_fallthru
        _
      %p410 = scmp.le.s32.totalorder 1, %s22
      %p411 = scmp.lt.s32.totalorder %s22, 5
      %p412 = pnand %p410, %p411
      %p413 = pneg %p412
      // Predicated region
      $region61: #{_lambda_.1} parent=5 // pred_check
        _
      $region62: #{_lambda_.1} parent=5 // pred_check_branch
        %415 = sbr.rel (%p412) target = $region64
      $region63: #{_lambda_.1} parent=5 // pred_region
        %s416 = ssub.s32 %s22, 1
        // Predicated region
        $region65: #{_lambda_.1} parent=63 // pred_check
          %p417 = pneg %p210
        $region66: #{_lambda_.1} parent=63 // pred_check_branch
          %419 = sbr.rel (%p417) target = $region68
        $region67: #{_lambda_.1} parent=63 // pred_region
          %420 = dma.done [#allocation5], 256
        $region68: #{_lambda_.1} parent=63 // pred_fallthru
          _
        // Predicated region
        $region69: #{_lambda_.1} parent=63 // pred_check
          %p421 = pneg %p273
        $region70: #{_lambda_.1} parent=63 // pred_check_branch
          %423 = sbr.rel (%p421) target = $region72
        $region71: #{_lambda_.1} parent=63 // pred_region
          %424 = dma.done [#allocation8], 512
        $region72: #{_lambda_.1} parent=63 // pred_fallthru
          _
        %p425 = scmp.lt.s32.totalorder %s32, 1
        %s426 = scalar_select %p425, %s32, 1
        %p427 = scmp.lt.s32.totalorder %s34, 0
        %s428 = scalar_select %p427, %s34, 0
        %s429 = sadd.s32 %s428, %s426
        %s430 = smul.addr %s429, 4
        %s431 = scalar_lea.vmem %s0, %s430
        %p432 = pneg %p69
        %p433 = pneg %p66
        %p434 = scmp.lt.s32.totalorder %s32, 1
        %s435 = scalar_select %p434, %s32, 1
        %s436 = smul.addr %s435, 4
        %s437 = scalar_lea.vmem %s1, %s436
        %p438 = pneg %p95
        %p439 = pneg %p92
        %p440 = scmp.lt.s32.totalorder %s32, 1
        %s441 = scalar_select %p440, %s32, 1
        %s442 = smul.addr %s441, 4
        %s443 = scalar_lea.vmem %s2, %s442
        %p444 = pneg %p121
        %p445 = pneg %p118
        %p446 = pneg %p142
        %p447 = pneg %p139
        %p448 = pneg %p163
        %p449 = pneg %p160
        %p450 = scmp.lt.s32.totalorder %s33, 1
        %s451 = scalar_select %p450, %s33, 1
        %s452 = scalar_lea.vmem %s5, %s451
        %p453 = pneg %p189
        %p454 = pneg %p186
        %p455 = pneg %p210
        %p456 = pneg %p207
        %p457 = pneg %p231
        %p458 = pneg %p228
        %p459 = pneg %p252
        %p460 = pneg %p249
        %p461 = pneg %p273
        %p462 = pneg %p270
        %p463 = pneg %p294
        %p464 = pneg %p291
        %p465 = pneg %p320
        %p466 = pneg %p317
        %s467 = sand.u32 %s307, 1
        %s468 = scalar_lea.sflag [#allocation6], %s467
        %s469 = sand.u32 %s307, 1
        %s470 = scalar_lea.vmem [#allocation9], %s469
        %p471 = scmp.lt.s32.totalorder %s32, 1
        %s472 = scalar_select %p471, %s32, 1
        %p473 = scmp.lt.s32.totalorder %s34, 0
        %s474 = scalar_select %p473, %s34, 0
        %s475 = sadd.s32 %s474, %s472
        %s476 = smul.addr %s475, 4
        %s477 = scalar_lea.vmem %s0, %s476
        %p478 = scmp.lt.s32.totalorder %s32, 1
        %s479 = scalar_select %p478, %s32, 1
        %s480 = smul.addr %s479, 4
        %s481 = scalar_lea.vmem %s1, %s480
        %p482 = scmp.lt.s32.totalorder %s32, 1
        %s483 = scalar_select %p482, %s32, 1
        %s484 = smul.addr %s483, 4
        %s485 = scalar_lea.vmem %s2, %s484
        %p486 = scmp.lt.s32.totalorder %s33, 1
        %s487 = scalar_select %p486, %s33, 1
        %s488 = scalar_lea.vmem %s5, %s487
        %p490 = scmp.eq.s32.totalorder %s33, 0
        %p491 = scmp.eq.s32.totalorder %s34, 0
        %p492 = pnand %p490, %p491
        %p493 = pneg %p492
        // Predicated region
        $region73: #{_lambda_.1} parent=63 // pred_check
          _
        $region74: #{_lambda_.1} parent=63 // pred_check_branch
          %495 = sbr.rel (%p492) target = $region76
        $region75: #{_lambda_.1} parent=63 // pred_region
          %v496 = vld [vmem:[%s485] sm:$0xf]
          %v497 = vld [vmem:[%s3] sm:$0x3]
          %vm498 = vcmask 31744
          %v500 = vsel %vm498, %v496, 0
          %vm502 = vcmask 1041408
          %v504 = vsel %vm502, %v497, 0
          %506 = vmatprep.subr.bf16.mxu0 0
          %507 = vmatpush1.bf16.msra.mxu0 0
          %508 = vmatprep.subr.bf16.mxu0 0
          %509 = vmatpush1.bf16.msra.mxu0 0
          %510 = vmatprep.subr.bf16.mxu0 0
          %511 = vmatpush1.bf16.msra.mxu0 0
          %512 = vmatprep.subr.bf16.mxu0 0
          %513 = vmatpush1.bf16.msra.mxu0 0
          %514 = vmatprep.subr.bf16.mxu0 0
          %515 = vmatpush1.bf16.msra.mxu0 0
          %516 = vmatprep.subr.bf16.mxu0 0
          %517 = vmatpush1.bf16.msra.mxu0 0
          %518 = vmatprep.subr.bf16.mxu0 0
          %519 = vmatpush1.bf16.msra.mxu0 0
          %520 = vmatprep.subr.bf16.mxu0 0
          %521 = vmatpush1.bf16.msra.mxu0 %v504
          %522 = vmatprep.subr.bf16.mxu0 0
          %523 = vmatpush2.bf16.msra.mxu0 0
          %524 = vmatprep.subr.bf16.mxu0 0
          %525 = vmatpush2.bf16.msra.mxu0 0
          %526 = vmatprep.subr.bf16.mxu0 0
          %527 = vmatpush2.bf16.msra.mxu0 0
          %528 = vmatprep.subr.bf16.mxu0 0
          %529 = vmatpush2.bf16.msra.mxu0 0
          %530 = vmatprep.subr.bf16.mxu0 0
          %531 = vmatpush2.bf16.msra.mxu0 0
          %532 = vmatprep.subr.bf16.mxu0 0
          %533 = vmatpush2.bf16.msra.mxu0 0
          %534 = vmatprep.subr.bf16.mxu0 0
          %535 = vmatpush2.bf16.msra.mxu0 0
          %536 = vmatprep.subr.bf16.mxu0 0
          %537 = vmatpush2.bf16.msra.mxu0 0
          %538 = vmatprep.mubr.bf16.mxu0 0
          %539 = vmatmul.mubr.bf16.gmra.mxu0 %v500
          %v540 = vpop.f32.mrf.mxu0
          %v541 = vadd.f32 0.0, %v540
          %v542 = vpop.f32.mrf.mxu0
          %v543 = vpop.f32.mrf.mxu0
          %v544 = vpop.f32.mrf.mxu0
          %545 = vdwg.mxu0
          %v546 = vpack.c.bf16 %v541, %v541
          %vm547 = vcmask 257024
          %548 = vst.msk [vmem:[#allocation2] sm:$0xf] %vm547, %v546
        $region76: #{_lambda_.1} parent=63 // pred_fallthru
          _
        %p549 = scmp.gt.s32.totalorder %s33, 0
        %p550 = pnand %p549, %p491
        %p551 = pneg %p550
        // Predicated region
        $region77: #{_lambda_.1} parent=63 // pred_check
          _
        $region78: #{_lambda_.1} parent=63 // pred_check_branch
          %553 = sbr.rel (%p550) target = $region80
        $region79: #{_lambda_.1} parent=63 // pred_region
          %v554 = vld [vmem:[#allocation3] sm:$0xff]
          %v555 = vpack.c.bf16 %v554, %v554
          %v556 = vld [vmem:[%s4] sm:$0xf]
          %v557 = vld [vmem:[%s4 + $0x4] sm:$0xf]
          %v558 = vld [vmem:[%s4 + $0x8] sm:$0xf]
          %v559 = vld [vmem:[%s4 + $0xc] sm:$0xf]
          %v564 = vunpack.c.l.b16 %v556
          %v565 = vunpack.c.l.b16 %v557
          %v566 = vunpack.c.l.b16 %v558
          %v567 = vunpack.c.l.b16 %v559
          %v568 = vpack.c.b16 %v565, %v564
          %v569 = vpack.c.b16 %v567, %v566
          %vm572 = vcmask 261120
          %v574 = vsel %vm572, %v555, 0
          %576 = vmatprep.subr.bf16.mxu0 0
          %577 = vmatpush1.bf16.msra.mxu0 0
          %578 = vmatprep.subr.bf16.mxu0 0
          %579 = vmatpush1.bf16.msra.mxu0 0
          %580 = vmatprep.subr.bf16.mxu0 0
          %581 = vmatpush1.bf16.msra.mxu0 0
          %582 = vmatprep.subr.bf16.mxu0 0
          %583 = vmatpush1.bf16.msra.mxu0 0
          %584 = vmatprep.subr.bf16.mxu0 0
          %585 = vmatpush1.bf16.msra.mxu0 0
          %586 = vmatprep.subr.bf16.mxu0 0
          %587 = vmatpush1.bf16.msra.mxu0 0
          %588 = vmatprep.subr.bf16.mxu0 0
          %589 = vmatpush1.bf16.msra.mxu0 %v569
          %590 = vmatprep.subr.bf16.mxu0 0
          %591 = vmatpush1.bf16.msra.mxu0 %v568
          %592 = vmatprep.subr.bf16.mxu0 0
          %593 = vmatpush2.bf16.msra.mxu0 0
          %594 = vmatprep.subr.bf16.mxu0 0
          %595 = vmatpush2.bf16.msra.mxu0 0
          %596 = vmatprep.subr.bf16.mxu0 0
          %597 = vmatpush2.bf16.msra.mxu0 0
          %598 = vmatprep.subr.bf16.mxu0 0
          %599 = vmatpush2.bf16.msra.mxu0 0
          %600 = vmatprep.subr.bf16.mxu0 0
          %601 = vmatpush2.bf16.msra.mxu0 0
          %602 = vmatprep.subr.bf16.mxu0 0
          %603 = vmatpush2.bf16.msra.mxu0 0
          %604 = vmatprep.subr.bf16.mxu0 0
          %605 = vmatpush2.bf16.msra.mxu0 0
          %606 = vmatprep.subr.bf16.mxu0 0
          %607 = vmatpush2.bf16.msra.mxu0 0
          %608 = vmatprep.mubr.bf16.mxu0 0
          %609 = vmatmul.mubr.bf16.gmra.mxu0 %v574
          %v610 = vpop.f32.mrf.mxu0
          %v611 = vadd.f32 0.0, %v610
          %v612 = vpop.f32.mrf.mxu0
          %v613 = vpop.f32.mrf.mxu0
          %v614 = vpop.f32.mrf.mxu0
          %615 = vdwg.mxu0
          %v616 = vpack.c.bf16 %v611, %v611
          %vm617 = vcmask 257024
          %618 = vst.msk [vmem:[#allocation2] sm:$0xf] %vm617, %v616
        $region80: #{_lambda_.1} parent=63 // pred_fallthru
          _
        %v619 = vld [vmem:[%s477] sm:$0xf]
        %v620 = vld [vmem:[#allocation2] sm:$0xf]
        %s621 = smul.u32 %s34, 8
        %v622 = vld [vmem:[%s488] sm:$0x1]
        %v624 = vlaneseq
        %v625 = vshrl.u32 %v624, 7
        %v626 = vsub.s32 0, %v625
        %v627 = vrot.slane %v622, %v626
        %vm629 = vcmask 64512
        %v631 = vsel %vm629, %v619, 0
        %vm633 = vcmask 1043456
        %v635 = vsel %vm633, %v620, 0
        %637 = vmatprep.subr.bf16.mxu0 0
        %638 = vmatpush1.bf16.msra.mxu0 0
        %639 = vmatprep.subr.bf16.mxu0 0
        %640 = vmatpush1.bf16.msra.mxu0 0
        %641 = vmatprep.subr.bf16.mxu0 0
        %642 = vmatpush1.bf16.msra.mxu0 0
        %643 = vmatprep.subr.bf16.mxu0 0
        %644 = vmatpush1.bf16.msra.mxu0 0
        %645 = vmatprep.subr.bf16.mxu0 0
        %646 = vmatpush1.bf16.msra.mxu0 0
        %647 = vmatprep.subr.bf16.mxu0 0
        %648 = vmatpush1.bf16.msra.mxu0 0
        %649 = vmatprep.subr.bf16.mxu0 0
        %650 = vmatpush1.bf16.msra.mxu0 0
        %651 = vmatprep.subr.bf16.mxu0 0
        %652 = vmatpush1.bf16.msra.mxu0 %v635
        %653 = vmatprep.subr.bf16.mxu0 0
        %654 = vmatpush2.bf16.msra.mxu0 0
        %655 = vmatprep.subr.bf16.mxu0 0
        %656 = vmatpush2.bf16.msra.mxu0 0
        %657 = vmatprep.subr.bf16.mxu0 0
        %658 = vmatpush2.bf16.msra.mxu0 0
        %659 = vmatprep.subr.bf16.mxu0 0
        %660 = vmatpush2.bf16.msra.mxu0 0
        %661 = vmatprep.subr.bf16.mxu0 0
        %662 = vmatpush2.bf16.msra.mxu0 0
        %663 = vmatprep.subr.bf16.mxu0 0
        %664 = vmatpush2.bf16.msra.mxu0 0
        %665 = vmatprep.subr.bf16.mxu0 0
        %666 = vmatpush2.bf16.msra.mxu0 0
        %667 = vmatprep.subr.bf16.mxu0 0
        %668 = vmatpush2.bf16.msra.mxu0 0
        %669 = vmatprep.mubr.bf16.mxu0 0
        %670 = vmatmul.mubr.bf16.gmra.mxu0 %v631
        %v671 = vpop.f32.mrf.mxu0
        %v672 = vadd.f32 %v627, %v671
        %v673 = vpop.f32.mrf.mxu0
        %v674 = vpop.f32.mrf.mxu0
        %v675 = vpop.f32.mrf.mxu0
        %676 = vdwg.mxu0
        %v677 = vmax.f32 %v672, 0.0
        %s678 = scalar_lea.vmem [#allocation3], %s621
        %vm679 = vcmask 261120
        %680 = vst.msk [vmem:[%s678] sm:$0xff] %vm679, %v677
        %p681 = scmp.eq.s32.totalorder %s33, 1
        %p682 = pnand %p681, %p491
        %p683 = pneg %p682
        // Predicated region
        $region81: #{_lambda_.1} parent=63 // pred_check
          _
        $region82: #{_lambda_.1} parent=63 // pred_check_branch
          %685 = sbr.rel (%p682) target = $region84
        $region83: #{_lambda_.1} parent=63 // pred_region
          %v686 = vld [vmem:[#allocation3] sm:$0xff]
          %v687 = vpack.c.bf16 %v686, %v686
          %v688 = vld [vmem:[#allocation4] sm:$0xf]
          %v689 = vld [vmem:[#allocation4 + $0x4] sm:$0xf]
          %v690 = vld [vmem:[#allocation4 + $0x8] sm:$0xf]
          %v691 = vld [vmem:[#allocation4 + $0xc] sm:$0xf]
          %v696 = vunpack.c.l.b16 %v688
          %v697 = vunpack.c.l.b16 %v689
          %v698 = vunpack.c.l.b16 %v690
          %v699 = vunpack.c.l.b16 %v691
          %v700 = vpack.c.b16 %v697, %v696
          %v701 = vpack.c.b16 %v699, %v698
          %v705 = vsel %vm679, %v687, 0
          %707 = vmatprep.subr.bf16.mxu0 0
          %708 = vmatpush1.bf16.msra.mxu0 0
          %709 = vmatprep.subr.bf16.mxu0 0
          %710 = vmatpush1.bf16.msra.mxu0 0
          %711 = vmatprep.subr.bf16.mxu0 0
          %712 = vmatpush1.bf16.msra.mxu0 0
          %713 = vmatprep.subr.bf16.mxu0 0
          %714 = vmatpush1.bf16.msra.mxu0 0
          %715 = vmatprep.subr.bf16.mxu0 0
          %716 = vmatpush1.bf16.msra.mxu0 0
          %717 = vmatprep.subr.bf16.mxu0 0
          %718 = vmatpush1.bf16.msra.mxu0 0
          %719 = vmatprep.subr.bf16.mxu0 0
          %720 = vmatpush1.bf16.msra.mxu0 %v701
          %721 = vmatprep.subr.bf16.mxu0 0
          %722 = vmatpush1.bf16.msra.mxu0 %v700
          %723 = vmatprep.subr.bf16.mxu0 0
          %724 = vmatpush2.bf16.msra.mxu0 0
          %725 = vmatprep.subr.bf16.mxu0 0
          %726 = vmatpush2.bf16.msra.mxu0 0
          %727 = vmatprep.subr.bf16.mxu0 0
          %728 = vmatpush2.bf16.msra.mxu0 0
          %729 = vmatprep.subr.bf16.mxu0 0
          %730 = vmatpush2.bf16.msra.mxu0 0
          %731 = vmatprep.subr.bf16.mxu0 0
          %732 = vmatpush2.bf16.msra.mxu0 0
          %733 = vmatprep.subr.bf16.mxu0 0
          %734 = vmatpush2.bf16.msra.mxu0 0
          %735 = vmatprep.subr.bf16.mxu0 0
          %736 = vmatpush2.bf16.msra.mxu0 0
          %737 = vmatprep.subr.bf16.mxu0 0
          %738 = vmatpush2.bf16.msra.mxu0 0
          %739 = vmatprep.mubr.bf16.mxu0 0
          %740 = vmatmul.mubr.bf16.gmra.mxu0 %v705
          %v741 = vpop.f32.mrf.mxu0
          %v742 = vadd.f32 0.0, %v741
          %v743 = vpop.f32.mrf.mxu0
          %v744 = vpop.f32.mrf.mxu0
          %v745 = vpop.f32.mrf.mxu0
          %746 = vdwg.mxu0
          %v747 = vld [vmem:[%s481] sm:$0xf]
          %v748 = vpack.c.bf16 %v742, %v742
          %v749 = vld [vmem:[%s7] sm:$0x1]
          %v751 = vlaneseq
          %v752 = vshrl.u32 %v751, 7
          %v753 = vsub.s32 0, %v752
          %v754 = vrot.slane %v749, %v753
          %v757 = vsel %vm629, %v747, 0
          %v760 = vsel %vm633, %v748, 0
          %762 = vmatprep.subr.bf16.mxu0 0
          %763 = vmatpush1.bf16.msra.mxu0 0
          %764 = vmatprep.subr.bf16.mxu0 0
          %765 = vmatpush1.bf16.msra.mxu0 0
          %766 = vmatprep.subr.bf16.mxu0 0
          %767 = vmatpush1.bf16.msra.mxu0 0
          %768 = vmatprep.subr.bf16.mxu0 0
          %769 = vmatpush1.bf16.msra.mxu0 0
          %770 = vmatprep.subr.bf16.mxu0 0
          %771 = vmatpush1.bf16.msra.mxu0 0
          %772 = vmatprep.subr.bf16.mxu0 0
          %773 = vmatpush1.bf16.msra.mxu0 0
          %774 = vmatprep.subr.bf16.mxu0 0
          %775 = vmatpush1.bf16.msra.mxu0 0
          %776 = vmatprep.subr.bf16.mxu0 0
          %777 = vmatpush1.bf16.msra.mxu0 %v760
          %778 = vmatprep.subr.bf16.mxu0 0
          %779 = vmatpush2.bf16.msra.mxu0 0
          %780 = vmatprep.subr.bf16.mxu0 0
          %781 = vmatpush2.bf16.msra.mxu0 0
          %782 = vmatprep.subr.bf16.mxu0 0
          %783 = vmatpush2.bf16.msra.mxu0 0
          %784 = vmatprep.subr.bf16.mxu0 0
          %785 = vmatpush2.bf16.msra.mxu0 0
          %786 = vmatprep.subr.bf16.mxu0 0
          %787 = vmatpush2.bf16.msra.mxu0 0
          %788 = vmatprep.subr.bf16.mxu0 0
          %789 = vmatpush2.bf16.msra.mxu0 0
          %790 = vmatprep.subr.bf16.mxu0 0
          %791 = vmatpush2.bf16.msra.mxu0 0
          %792 = vmatprep.subr.bf16.mxu0 0
          %793 = vmatpush2.bf16.msra.mxu0 0
          %794 = vmatprep.mubr.bf16.mxu0 0
          %795 = vmatmul.mubr.bf16.gmra.mxu0 %v757
          %v796 = vpop.f32.mrf.mxu0
          %v797 = vadd.f32 %v754, %v796
          %v798 = vpop.f32.mrf.mxu0
          %v799 = vpop.f32.mrf.mxu0
          %v800 = vpop.f32.mrf.mxu0
          %801 = vdwg.mxu0
          %v802 = vmax.f32 %v797, 0.0
          %v803 = vld [vmem:[%s8] sm:$0xff]
          %v804 = vld [vmem:[%s8 + $0x8] sm:$0xff]
          %v805 = vld [vmem:[%s8 + $0x10] sm:$0xff]
          %v806 = vld [vmem:[%s8 + $0x18] sm:$0xff]
          %v807 = vld [vmem:[#allocation7] sm:$0xff]
          %v808 = vld [vmem:[#allocation7 + $0x8] sm:$0xff]
          %v809 = vld [vmem:[#allocation7 + $0x10] sm:$0xff]
          %v810 = vld [vmem:[#allocation7 + $0x18] sm:$0xff]
          %v812 = vrot.slane %v802, 1
          %v813 = vsel %vm679, %v812, 0
          %815 = vmatprep.subr.mxu0 0.0
          %816 = vmatpush1.msra.mxu0 0.0
          %817 = vmatprep.subr.mxu0 0.0
          %818 = vmatpush1.msra.mxu0 0.0
          %819 = vmatprep.subr.mxu0 0.0
          %820 = vmatpush1.msra.mxu0 0.0
          %821 = vmatprep.subr.mxu0 0.0
          %822 = vmatpush1.msra.mxu0 0.0
          %823 = vmatprep.subr.mxu0 0.0
          %824 = vmatpush1.msra.mxu0 0.0
          %825 = vmatprep.subr.mxu0 0.0
          %826 = vmatpush1.msra.mxu0 0.0
          %827 = vmatprep.subr.mxu0 0.0
          %828 = vmatpush1.msra.mxu0 0.0
          %829 = vmatprep.subr.mxu0 0.0
          %830 = vmatpush1.msra.mxu0 0.0
          %831 = vmatprep.subr.mxu0 0.0
          %832 = vmatpush1.msra.mxu0 0.0
          %833 = vmatprep.subr.mxu0 0.0
          %834 = vmatpush1.msra.mxu0 0.0
          %835 = vmatprep.subr.mxu0 0.0
          %836 = vmatpush1.msra.mxu0 0.0
          %837 = vmatprep.subr.mxu0 0.0
          %838 = vmatpush1.msra.mxu0 0.0
          %839 = vmatprep.subr.mxu0 0.0
          %840 = vmatpush1.msra.mxu0 %v810
          %841 = vmatprep.subr.mxu0 0.0
          %842 = vmatpush1.msra.mxu0 %v809
          %843 = vmatprep.subr.mxu0 0.0
          %844 = vmatpush1.msra.mxu0 %v808
          %845 = vmatprep.subr.mxu0 0.0
          %846 = vmatpush1.msra.mxu0 %v807
          %847 = vmatprep.subr.mxu0 0.0
          %848 = vmatpush2.msra.mxu0 0.0
          %849 = vmatprep.subr.mxu0 0.0
          %850 = vmatpush2.msra.mxu0 0.0
          %851 = vmatprep.subr.mxu0 0.0
          %852 = vmatpush2.msra.mxu0 0.0
          %853 = vmatprep.subr.mxu0 0.0
          %854 = vmatpush2.msra.mxu0 0.0
          %855 = vmatprep.subr.mxu0 0.0
          %856 = vmatpush2.msra.mxu0 0.0
          %857 = vmatprep.subr.mxu0 0.0
          %858 = vmatpush2.msra.mxu0 0.0
          %859 = vmatprep.subr.mxu0 0.0
          %860 = vmatpush2.msra.mxu0 0.0
          %861 = vmatprep.subr.mxu0 0.0
          %862 = vmatpush2.msra.mxu0 0.0
          %863 = vmatprep.subr.mxu0 0.0
          %864 = vmatpush2.msra.mxu0 0.0
          %865 = vmatprep.subr.mxu0 0.0
          %866 = vmatpush2.msra.mxu0 0.0
          %867 = vmatprep.subr.mxu0 0.0
          %868 = vmatpush2.msra.mxu0 0.0
          %869 = vmatprep.subr.mxu0 0.0
          %870 = vmatpush2.msra.mxu0 0.0
          %871 = vmatprep.subr.mxu0 0.0
          %872 = vmatpush2.msra.mxu0 0.0
          %873 = vmatprep.subr.mxu0 0.0
          %874 = vmatpush2.msra.mxu0 0.0
          %875 = vmatprep.subr.mxu0 0.0
          %876 = vmatpush2.msra.mxu0 0.0
          %877 = vmatprep.subr.mxu0 0.0
          %878 = vmatpush2.msra.mxu0 0.0
          %879 = vmatprep.mubr.f32.mxu0 0.0
          %880 = vmatmul.mubr.f32.gmra.mxu0 %v813
          %v881 = vpop.f32.mrf.mxu0
          %v882 = vadd.f32 0.0, %v881
          %v883 = vpop.f32.mrf.mxu0
          %884 = vdwg.mxu0
          %v885 = vsel %vm679, %v802, 0
          %887 = vmatprep.subr.mxu0 0.0
          %888 = vmatpush1.msra.mxu0 0.0
          %889 = vmatprep.subr.mxu0 0.0
          %890 = vmatpush1.msra.mxu0 0.0
          %891 = vmatprep.subr.mxu0 0.0
          %892 = vmatpush1.msra.mxu0 0.0
          %893 = vmatprep.subr.mxu0 0.0
          %894 = vmatpush1.msra.mxu0 0.0
          %895 = vmatprep.subr.mxu0 0.0
          %896 = vmatpush1.msra.mxu0 0.0
          %897 = vmatprep.subr.mxu0 0.0
          %898 = vmatpush1.msra.mxu0 0.0
          %899 = vmatprep.subr.mxu0 0.0
          %900 = vmatpush1.msra.mxu0 0.0
          %901 = vmatprep.subr.mxu0 0.0
          %902 = vmatpush1.msra.mxu0 0.0
          %903 = vmatprep.subr.mxu0 0.0
          %904 = vmatpush1.msra.mxu0 0.0
          %905 = vmatprep.subr.mxu0 0.0
          %906 = vmatpush1.msra.mxu0 0.0
          %907 = vmatprep.subr.mxu0 0.0
          %908 = vmatpush1.msra.mxu0 0.0
          %909 = vmatprep.subr.mxu0 0.0
          %910 = vmatpush1.msra.mxu0 0.0
          %911 = vmatprep.subr.mxu0 0.0
          %912 = vmatpush1.msra.mxu0 %v806
          %913 = vmatprep.subr.mxu0 0.0
          %914 = vmatpush1.msra.mxu0 %v805
          %915 = vmatprep.subr.mxu0 0.0
          %916 = vmatpush1.msra.mxu0 %v804
          %917 = vmatprep.subr.mxu0 0.0
          %918 = vmatpush1.msra.mxu0 %v803
          %919 = vmatprep.subr.mxu0 0.0
          %920 = vmatpush2.msra.mxu0 0.0
          %921 = vmatprep.subr.mxu0 0.0
          %922 = vmatpush2.msra.mxu0 0.0
          %923 = vmatprep.subr.mxu0 0.0
          %924 = vmatpush2.msra.mxu0 0.0
          %925 = vmatprep.subr.mxu0 0.0
          %926 = vmatpush2.msra.mxu0 0.0
          %927 = vmatprep.subr.mxu0 0.0
          %928 = vmatpush2.msra.mxu0 0.0
          %929 = vmatprep.subr.mxu0 0.0
          %930 = vmatpush2.msra.mxu0 0.0
          %931 = vmatprep.subr.mxu0 0.0
          %932 = vmatpush2.msra.mxu0 0.0
          %933 = vmatprep.subr.mxu0 0.0
          %934 = vmatpush2.msra.mxu0 0.0
          %935 = vmatprep.subr.mxu0 0.0
          %936 = vmatpush2.msra.mxu0 0.0
          %937 = vmatprep.subr.mxu0 0.0
          %938 = vmatpush2.msra.mxu0 0.0
          %939 = vmatprep.subr.mxu0 0.0
          %940 = vmatpush2.msra.mxu0 0.0
          %941 = vmatprep.subr.mxu0 0.0
          %942 = vmatpush2.msra.mxu0 0.0
          %943 = vmatprep.subr.mxu0 0.0
          %944 = vmatpush2.msra.mxu0 0.0
          %945 = vmatprep.subr.mxu0 0.0
          %946 = vmatpush2.msra.mxu0 0.0
          %947 = vmatprep.subr.mxu0 0.0
          %948 = vmatpush2.msra.mxu0 0.0
          %949 = vmatprep.subr.mxu0 0.0
          %950 = vmatpush2.msra.mxu0 0.0
          %951 = vmatprep.mubr.f32.mxu0 0.0
          %952 = vmatmul.mubr.f32.gmra.mxu0 %v885
          %v953 = vpop.f32.mrf.mxu0
          %v954 = vadd.f32 %v882, %v953
          %v955 = vpop.f32.mrf.mxu0
          %956 = vdwg.mxu0
          %v957 = vld [vmem:[%s10] sm:$0x1]
          %v958 = vadd.f32 %v954, %v957
          %vm959 = vcmask 24576
          %960 = vst.msk [vmem:[%s470] sm:$0x1] %vm959, %v958
        $region84: #{_lambda_.1} parent=63 // pred_fallthru
          _
        %s961 = sand.u32 %s307, 1
        %s962 = scalar_lea.sflag [#allocation6], %s961
        %s963 = sand.u32 %s307, 1
        %s964 = scalar_lea.vmem [#allocation9], %s963
        // Predicated region
        $region85: #{_lambda_.1} parent=63 // pred_check
          %p965 = pneg %p317
        $region86: #{_lambda_.1} parent=63 // pred_check_branch
          %967 = sbr.rel (%p965) target = $region88
        $region87: #{_lambda_.1} parent=63 // pred_region
          %s969 = ssub.s32 16, 16
          %970 = vsyncadd %s962, %s969
          %s971 = smul.addr %s32, 16
          %s972 = scalar_lea.hbm %s11, %s971
          %s974 = sshll.u32 %s964, 4
          %s975 = int_to_ptr.vmem [resolvable:$true] %s974
          %977 = dma.vmem_to_hbm [thread:$0]  %s975, 16, %s972, %s962
        $region88: #{_lambda_.1} parent=63 // pred_fallthru
          _
      $region64: #{_lambda_.1} parent=5 // pred_fallthru
        _
      %p978 = scmp.le.s32.totalorder 2, %s22
      // Predicated region
      $region89: #{_lambda_.1} parent=5 // pred_check
        %p979 = pneg %p978
      $region90: #{_lambda_.1} parent=5 // pred_check_branch
        %981 = sbr.rel (%p979) target = $region92
      $region91: #{_lambda_.1} parent=5 // pred_region
        %s982 = ssub.s32 %s22, 2
        // Predicated region
        $region93: #{_lambda_.1} parent=91 // pred_check
          %p983 = pneg %p323
        $region94: #{_lambda_.1} parent=91 // pred_check_branch
          %985 = sbr.rel (%p983) target = $region96
        $region95: #{_lambda_.1} parent=91 // pred_region
          %s986 = sand.u32 %s308, 1
          %s987 = scalar_lea.sflag [#allocation6], %s986
          %s988 = sand.u32 %s308, 1
          %s989 = scalar_lea.vmem [#allocation9], %s988
          %990 = dma.done %s987, 16
        $region96: #{_lambda_.1} parent=91 // pred_fallthru
          _
      $region92: #{_lambda_.1} parent=5 // pred_fallthru
        _
    $region6: #{_lambda_.1} parent=1 // loop_footer
      %s26 = sadd.s32 1, %s22
    $region7: #{_lambda_.1} parent=1 // loop_footer_branch
      %21 = sbr.rel target = $region3
    $region8: #{_lambda_.1} parent=1 // loop_exit
      _
    %991 = vsyncpa [#allocation5], 1
    %s992 = scalar_lea.sflag [#allocation5], 1
    %993 = vsyncpa %s992, 1
    %994 = vsyncpa [#allocation8], 1
    %995 = vsyncpa [#allocation6], 1
    %s996 = scalar_lea.sflag [#allocation6], 1
    %997 = vsyncpa %s996, 1

</llo_original>
